<compile_context>
chip_gen: v5e
topology: v5e:2x2
jax: 0.10.0
libtpu: 0.0.40
codegen_flags: <defaults>
</compile_context>

<pallas_src>
import jax
import jax.numpy as jnp
from jax.experimental import pallas as pl
from jax.experimental.pallas import tpu as pltpu

LSTM_H = 16  # lstm_i_dim == lstm_h_dim == 16 in the PyTorch module


def drqn_kernel(x_ref, hc0_ref, fc1_ref, fc2_ref, lstm_ref, outw_ref,
                out_ref, hn_ref, cn_ref):
    H = LSTM_H
    S, D = x_ref.shape

    x = x_ref[...]                                              # (S, D)

    # fc1 + relu  (hidden dim zero-padded to 256 lanes; bias is last row)
    w1 = fc1_ref[0:D, :]
    b1 = fc1_ref[D:D + 1, :]
    h1 = jnp.maximum(
        jnp.dot(x, w1, preferred_element_type=jnp.float32) + b1, 0.0)

    # fc2 + relu -> LSTM inputs, (S, H)
    d1p = fc2_ref.shape[0] - 1                                  # 256
    w2 = fc2_ref[0:d1p, :]
    b2 = fc2_ref[d1p:d1p + 1, :]
    h2 = jnp.maximum(
        jnp.dot(h1, w2, preferred_element_type=jnp.float32) + b2, 0.0)

    # LSTM input projection hoisted out of the recurrence:
    # one (S, H) @ (H, 4H) MXU matmul with fused bias.
    wih = lstm_ref[0:H, :]
    whh = lstm_ref[H:2 * H, :]
    bl = lstm_ref[2 * H:2 * H + 1, :]
    gx = jnp.dot(h2, wih, preferred_element_type=jnp.float32) + bl

    h = hc0_ref[0:1, :]                                         # (1, H)
    c = hc0_ref[1:2, :]                                         # (1, H)

    # Gate column order (set in prepare_params): [i, f, o, g], g pre-scaled x2
    # so a single sigmoid over all 4H lanes covers every gate
    # (tanh(x) == 2*sigmoid(2x) - 1).  Static Python unroll: S is small and
    # static -> full LLO scheduler visibility; h rows stay in vregs.
    hs = []
    for s in range(S):
        gates = gx[s:s + 1, :] + jnp.dot(h, whh,
                                         preferred_element_type=jnp.float32)
        sig = jax.nn.sigmoid(gates)                             # 1 EUP pass, 4H lanes
        i_g = sig[:, 0:H]
        f_g = sig[:, H:2 * H]
        o_g = sig[:, 2 * H:3 * H]
        g_g = 2.0 * sig[:, 3 * H:4 * H] - 1.0                   # == tanh(orig g pre-act)
        c = f_g * c + i_g * g_g
        h = o_g * jnp.tanh(c)
        hs.append(h)

    hn_ref[...] = h
    cn_ref[...] = c

    # Output Linear hoisted out of the loop: one (S, H) @ (H, A) matmul and a
    # single store; per-step hidden states never touch VMEM scratch.
    h_all = jnp.concatenate(hs, axis=0)                         # (S, H), in vregs
    wout = outw_ref[0:H, :]
    bout = outw_ref[H:H + 1, :]
    out_ref[...] = (jnp.dot(h_all, wout,
                            preferred_element_type=jnp.float32) + bout)


def prepare_params(params):
    """One-time weight prep: pad / transpose / reorder / pack (NOT per call)."""
    H = LSTM_H
    state_dim = params["w1"].shape[1]
    D1 = params["w1"].shape[0]                                  # 200
    D1p = ((D1 + 127) // 128) * 128                             # -> 256 lanes

    # fc1 packed: [W1^T ; b1], hidden dim zero-padded to 256 lanes (exact:
    # relu(0)=0 and the corresponding w2 rows are zero).
    w1t = jnp.zeros((state_dim, D1p), jnp.float32).at[:, :D1].set(params["w1"].T)
    b1p = jnp.zeros((1, D1p), jnp.float32).at[:, :D1].set(params["b1"])
    fc1 = jnp.concatenate([w1t, b1p], axis=0)                   # (D+1, 256)

    # fc2 packed: [W2^T ; b2]
    w2t = jnp.zeros((D1p, H), jnp.float32).at[:D1, :].set(params["w2"].T)
    fc2 = jnp.concatenate([w2t, params["b2"].reshape(1, H)], axis=0)  # (257, 16)

    # LSTM: reorder gate rows [i, f, g, o] -> [i, f, o, g] with static slices
    # (no runtime gather), then pre-scale the g-gate columns by 2 so the kernel
    # can use the tanh(x) = 2*sigmoid(2x) - 1 identity with one sigmoid.
    def reorder(w):                                             # rows: 4H
        return jnp.concatenate([w[:2 * H], w[3 * H:4 * H], w[2 * H:3 * H]],
                               axis=0)

    def scale_g(wt):                                            # cols: [i,f,o,g]
        return jnp.concatenate([wt[:, :3 * H], 2.0 * wt[:, 3 * H:]], axis=1)

    wih_t = scale_g(reorder(params["w_ih"]).T)                  # (H, 4H)
    whh_t = scale_g(reorder(params["w_hh"]).T)                  # (H, 4H)
    bl = scale_g(reorder(params["b_ih"] + params["b_hh"]).reshape(1, 4 * H))
    lstm = jnp.concatenate([wih_t, whh_t, bl], axis=0)          # (2H+1, 4H)

    # Output Linear packed: [W_out^T ; b_out]
    outw = jnp.concatenate([params["w_out"].T,
                            params["b_out"].reshape(1, -1)], axis=0)  # (H+1, A)

    return {"fc1": fc1, "fc2": fc2, "lstm": lstm, "out": outw}


@jax.jit
def net_forward(x, hidden, prepped):
    """Pallas implementation of Net.forward(x, hidden) using prepared params."""
    h0, c0 = hidden                                             # (1, 1, H) each
    S = x.shape[0]
    H = LSTM_H
    A = prepped["out"].shape[1]

    hc0 = jnp.concatenate([h0.reshape(1, H), c0.reshape(1, H)], axis=0)  # (2, H)

    vmem = pl.BlockSpec(memory_space=pltpu.MemorySpace.VMEM)
    action, hn, cn = pl.pallas_call(
        drqn_kernel,
        out_shape=(jax.ShapeDtypeStruct((S, A), jnp.float32),
                   jax.ShapeDtypeStruct((1, H), jnp.float32),
                   jax.ShapeDtypeStruct((1, H), jnp.float32)),
        in_specs=[vmem] * 6,
        out_specs=(vmem, vmem, vmem),
    )(x, hc0, prepped["fc1"], prepped["fc2"], prepped["lstm"], prepped["out"])

    # restore PyTorch shapes: action_prob (S, 1, A), hidden each (1, 1, H)
    return action.reshape(S, 1, A), (hn.reshape(1, 1, H), cn.reshape(1, 1, H))


def net_forward_ref(x, hidden, params):
    """Pure-JAX reference (mirrors PyTorch semantics, original gate order)."""
    H = LSTM_H
    h1 = jax.nn.relu(x @ params["w1"].T + params["b1"])
    h2 = jax.nn.relu(h1 @ params["w2"].T + params["b2"])
    h = hidden[0].reshape(1, H)
    c = hidden[1].reshape(1, H)
    outs = []
    for s in range(x.shape[0]):
        x_t = h2[s:s + 1]
        gates = (x_t @ params["w_ih"].T + params["b_ih"]
                 + h @ params["w_hh"].T + params["b_hh"])
        i_g = jax.nn.sigmoid(gates[:, 0:H])
        f_g = jax.nn.sigmoid(gates[:, H:2 * H])
        g_g = jnp.tanh(gates[:, 2 * H:3 * H])
        o_g = jax.nn.sigmoid(gates[:, 3 * H:4 * H])
        c = f_g * c + i_g * g_g
        h = o_g * jnp.tanh(c)
        outs.append(h @ params["w_out"].T + params["b_out"])
    action = jnp.stack(outs, axis=0)                            # (S, 1, A)
    return action, (h.reshape(1, 1, H), c.reshape(1, 1, H))


def make_params(key, state_dim, action_dim):
    """Deterministic synthetic parameters (PyTorch shapes, Linear = (out, in))."""
    H = LSTM_H
    ks = jax.random.split(key, 10)
    return {
        "w1": 0.1 * jax.random.normal(ks[0], (200, state_dim), jnp.float32),
        "b1": 0.1 * jax.random.normal(ks[1], (200,), jnp.float32),
        "w2": 0.1 * jax.random.normal(ks[2], (H, 200), jnp.float32),
        "b2": 0.1 * jax.random.normal(ks[3], (H,), jnp.float32),
        "w_ih": 0.1 * jax.random.normal(ks[4], (4 * H, H), jnp.float32),
        "w_hh": 0.1 * jax.random.normal(ks[5], (4 * H, H), jnp.float32),
        "b_ih": 0.1 * jax.random.normal(ks[6], (4 * H,), jnp.float32),
        "b_hh": 0.1 * jax.random.normal(ks[7], (4 * H,), jnp.float32),
        "w_out": 0.1 * jax.random.normal(ks[8], (action_dim, H), jnp.float32),
        "b_out": 0.1 * jax.random.normal(ks[9], (action_dim,), jnp.float32),
    }


if __name__ == "__main__":
    state_dim, action_dim, seq = 32, 4, 8

    key = jax.random.PRNGKey(0)
    kp, kx, kh, kc = jax.random.split(key, 4)

    params = make_params(kp, state_dim, action_dim)
    x = jax.random.normal(kx, (seq, state_dim), jnp.float32)
    h0 = jax.random.normal(kh, (1, 1, LSTM_H), jnp.float32)
    c0 = jax.random.normal(kc, (1, 1, LSTM_H), jnp.float32)

    # One-time weight preparation (outside the hot path).
    prepped = jax.block_until_ready(prepare_params(params))

    action, (hn, cn) = net_forward(x, (h0, c0), prepped)
    jax.block_until_ready((action, hn, cn))

    # correctness check vs pure-JAX reference (original PyTorch gate order)
    action_r, (hn_r, cn_r) = net_forward_ref(x, (h0, c0), params)
    assert action.shape == (seq, 1, action_dim)
    assert hn.shape == (1, 1, LSTM_H) and cn.shape == (1, 1, LSTM_H)
    assert jnp.allclose(action, action_r, atol=1e-4), "action mismatch"
    assert jnp.allclose(hn, hn_r, atol=1e-4), "h_n mismatch"
    assert jnp.allclose(cn, cn_r, atol=1e-4), "c_n mismatch"

    print("KERNEL_OK")
</pallas_src>

<mosaic_0001>
module attributes {stable_mosaic.version = 11 : i64} {
  func.func @drqn_kernel(%arg0: memref<8x32xf32, #tpu.memory_space<vmem>>, %arg1: memref<2x16xf32, #tpu.memory_space<vmem>>, %arg2: memref<33x256xf32, #tpu.memory_space<vmem>>, %arg3: memref<257x16xf32, #tpu.memory_space<vmem>>, %arg4: memref<33x64xf32, #tpu.memory_space<vmem>>, %arg5: memref<17x4xf32, #tpu.memory_space<vmem>>, %arg6: memref<8x4xf32, #tpu.memory_space<vmem>>, %arg7: memref<1x16xf32, #tpu.memory_space<vmem>>, %arg8: memref<1x16xf32, #tpu.memory_space<vmem>>) attributes {dimension_semantics = [], scalar_prefetch = 0 : i64, scratch_operands = 0 : i64, tpu.core_type = #tpu.core_type<tc>} {
    %c0 = arith.constant 0 : index
    %c0_0 = arith.constant 0 : index
    %0 = vector.load %arg0[%c0, %c0_0] : memref<8x32xf32, #tpu.memory_space<vmem>>, vector<8x32xf32>
    %c0_1 = arith.constant 0 : index
    %c0_2 = arith.constant 0 : index
    %1 = vector.load %arg2[%c0_1, %c0_2] : memref<33x256xf32, #tpu.memory_space<vmem>>, vector<32x256xf32>
    %c32 = arith.constant 32 : index
    %c0_3 = arith.constant 0 : index
    %2 = vector.load %arg2[%c32, %c0_3] : memref<33x256xf32, #tpu.memory_space<vmem>>, vector<1x256xf32>
    %cst = arith.constant dense<0.000000e+00> : vector<8x256xf32>
    %3 = tpu.matmul %0, %1, %cst {dimension_numbers = #tpu.dot_dimension_numbers<[1], [0], [0], [1], [0, 0, 1, 1], [], []>} : vector<8x32xf32>, vector<32x256xf32>, vector<8x256xf32> -> vector<8x256xf32>
    %4 = vector.broadcast %2 : vector<1x256xf32> to vector<8x256xf32>
    %5 = arith.addf %3, %4 : vector<8x256xf32>
    %cst_4 = arith.constant 0.000000e+00 : f32
    %6 = vector.broadcast %cst_4 : f32 to vector<8x256xf32>
    %7 = arith.maximumf %5, %6 : vector<8x256xf32>
    %c0_5 = arith.constant 0 : index
    %c0_6 = arith.constant 0 : index
    %8 = vector.load %arg3[%c0_5, %c0_6] : memref<257x16xf32, #tpu.memory_space<vmem>>, vector<256x16xf32>
    %c256 = arith.constant 256 : index
    %c0_7 = arith.constant 0 : index
    %9 = vector.load %arg3[%c256, %c0_7] : memref<257x16xf32, #tpu.memory_space<vmem>>, vector<1x16xf32>
    %cst_8 = arith.constant dense<0.000000e+00> : vector<8x16xf32>
    %10 = tpu.matmul %7, %8, %cst_8 {dimension_numbers = #tpu.dot_dimension_numbers<[1], [0], [0], [1], [0, 0, 1, 1], [], []>} : vector<8x256xf32>, vector<256x16xf32>, vector<8x16xf32> -> vector<8x16xf32>
    %11 = vector.broadcast %9 : vector<1x16xf32> to vector<8x16xf32>
    %12 = arith.addf %10, %11 : vector<8x16xf32>
    %cst_9 = arith.constant 0.000000e+00 : f32
    %13 = vector.broadcast %cst_9 : f32 to vector<8x16xf32>
    %14 = arith.maximumf %12, %13 : vector<8x16xf32>
    %c0_10 = arith.constant 0 : index
    %c0_11 = arith.constant 0 : index
    %15 = vector.load %arg4[%c0_10, %c0_11] : memref<33x64xf32, #tpu.memory_space<vmem>>, vector<16x64xf32>
    %c16 = arith.constant 16 : index
    %c0_12 = arith.constant 0 : index
    %16 = vector.load %arg4[%c16, %c0_12] : memref<33x64xf32, #tpu.memory_space<vmem>>, vector<16x64xf32>
    %c32_13 = arith.constant 32 : index
    %c0_14 = arith.constant 0 : index
    %17 = vector.load %arg4[%c32_13, %c0_14] : memref<33x64xf32, #tpu.memory_space<vmem>>, vector<1x64xf32>
    %cst_15 = arith.constant dense<0.000000e+00> : vector<8x64xf32>
    %18 = tpu.matmul %14, %15, %cst_15 {dimension_numbers = #tpu.dot_dimension_numbers<[1], [0], [0], [1], [0, 0, 1, 1], [], []>} : vector<8x16xf32>, vector<16x64xf32>, vector<8x64xf32> -> vector<8x64xf32>
    %19 = vector.broadcast %17 : vector<1x64xf32> to vector<8x64xf32>
    %20 = arith.addf %18, %19 : vector<8x64xf32>
    %c0_16 = arith.constant 0 : index
    %c0_17 = arith.constant 0 : index
    %21 = vector.load %arg1[%c0_16, %c0_17] : memref<2x16xf32, #tpu.memory_space<vmem>>, vector<1x16xf32>
    %c1 = arith.constant 1 : index
    %c0_18 = arith.constant 0 : index
    %22 = vector.load %arg1[%c1, %c0_18] : memref<2x16xf32, #tpu.memory_space<vmem>>, vector<1x16xf32>
    %23 = vector.extract_strided_slice %20 {offsets = [0, 0], sizes = [1, 64], strides = [1, 1]} : vector<8x64xf32> to vector<1x64xf32>
    %cst_19 = arith.constant dense<0.000000e+00> : vector<1x64xf32>
    %24 = tpu.matmul %21, %16, %cst_19 {dimension_numbers = #tpu.dot_dimension_numbers<[1], [0], [0], [1], [0, 0, 1, 1], [], []>} : vector<1x16xf32>, vector<16x64xf32>, vector<1x64xf32> -> vector<1x64xf32>
    %25 = arith.addf %23, %24 : vector<1x64xf32>
    %26 = arith.negf %25 : vector<1x64xf32>
    %27 = math.exp %26 : vector<1x64xf32>
    %cst_20 = arith.constant 1.000000e+00 : f32
    %28 = vector.broadcast %cst_20 : f32 to vector<1x64xf32>
    %29 = arith.addf %28, %27 : vector<1x64xf32>
    %30 = arith.divf %28, %29 : vector<1x64xf32>
    %31 = vector.extract_strided_slice %30 {offsets = [0, 0], sizes = [1, 16], strides = [1, 1]} : vector<1x64xf32> to vector<1x16xf32>
    %32 = vector.extract_strided_slice %30 {offsets = [0, 16], sizes = [1, 16], strides = [1, 1]} : vector<1x64xf32> to vector<1x16xf32>
    %33 = vector.extract_strided_slice %30 {offsets = [0, 32], sizes = [1, 16], strides = [1, 1]} : vector<1x64xf32> to vector<1x16xf32>
    %34 = vector.extract_strided_slice %30 {offsets = [0, 48], sizes = [1, 16], strides = [1, 1]} : vector<1x64xf32> to vector<1x16xf32>
    %cst_21 = arith.constant 2.000000e+00 : f32
    %35 = vector.broadcast %cst_21 : f32 to vector<1x16xf32>
    %36 = arith.mulf %35, %34 : vector<1x16xf32>
    %cst_22 = arith.constant 1.000000e+00 : f32
    %37 = vector.broadcast %cst_22 : f32 to vector<1x16xf32>
    %38 = arith.subf %36, %37 : vector<1x16xf32>
    %39 = arith.mulf %32, %22 : vector<1x16xf32>
    %40 = arith.mulf %31, %38 : vector<1x16xf32>
    %41 = arith.addf %39, %40 : vector<1x16xf32>
    %42 = math.tanh %41 : vector<1x16xf32>
    %43 = arith.mulf %33, %42 : vector<1x16xf32>
    %44 = vector.extract_strided_slice %20 {offsets = [1, 0], sizes = [1, 64], strides = [1, 1]} : vector<8x64xf32> to vector<1x64xf32>
    %cst_23 = arith.constant dense<0.000000e+00> : vector<1x64xf32>
    %45 = tpu.matmul %43, %16, %cst_23 {dimension_numbers = #tpu.dot_dimension_numbers<[1], [0], [0], [1], [0, 0, 1, 1], [], []>} : vector<1x16xf32>, vector<16x64xf32>, vector<1x64xf32> -> vector<1x64xf32>
    %46 = arith.addf %44, %45 : vector<1x64xf32>
    %47 = arith.negf %46 : vector<1x64xf32>
    %48 = math.exp %47 : vector<1x64xf32>
    %cst_24 = arith.constant 1.000000e+00 : f32
    %49 = vector.broadcast %cst_24 : f32 to vector<1x64xf32>
    %50 = arith.addf %49, %48 : vector<1x64xf32>
    %51 = arith.divf %49, %50 : vector<1x64xf32>
    %52 = vector.extract_strided_slice %51 {offsets = [0, 0], sizes = [1, 16], strides = [1, 1]} : vector<1x64xf32> to vector<1x16xf32>
    %53 = vector.extract_strided_slice %51 {offsets = [0, 16], sizes = [1, 16], strides = [1, 1]} : vector<1x64xf32> to vector<1x16xf32>
    %54 = vector.extract_strided_slice %51 {offsets = [0, 32], sizes = [1, 16], strides = [1, 1]} : vector<1x64xf32> to vector<1x16xf32>
    %55 = vector.extract_strided_slice %51 {offsets = [0, 48], sizes = [1, 16], strides = [1, 1]} : vector<1x64xf32> to vector<1x16xf32>
    %cst_25 = arith.constant 2.000000e+00 : f32
    %56 = vector.broadcast %cst_25 : f32 to vector<1x16xf32>
    %57 = arith.mulf %56, %55 : vector<1x16xf32>
    %cst_26 = arith.constant 1.000000e+00 : f32
    %58 = vector.broadcast %cst_26 : f32 to vector<1x16xf32>
    %59 = arith.subf %57, %58 : vector<1x16xf32>
    %60 = arith.mulf %53, %41 : vector<1x16xf32>
    %61 = arith.mulf %52, %59 : vector<1x16xf32>
    %62 = arith.addf %60, %61 : vector<1x16xf32>
    %63 = math.tanh %62 : vector<1x16xf32>
    %64 = arith.mulf %54, %63 : vector<1x16xf32>
    %65 = vector.extract_strided_slice %20 {offsets = [2, 0], sizes = [1, 64], strides = [1, 1]} : vector<8x64xf32> to vector<1x64xf32>
    %cst_27 = arith.constant dense<0.000000e+00> : vector<1x64xf32>
    %66 = tpu.matmul %64, %16, %cst_27 {dimension_numbers = #tpu.dot_dimension_numbers<[1], [0], [0], [1], [0, 0, 1, 1], [], []>} : vector<1x16xf32>, vector<16x64xf32>, vector<1x64xf32> -> vector<1x64xf32>
    %67 = arith.addf %65, %66 : vector<1x64xf32>
    %68 = arith.negf %67 : vector<1x64xf32>
    %69 = math.exp %68 : vector<1x64xf32>
    %cst_28 = arith.constant 1.000000e+00 : f32
    %70 = vector.broadcast %cst_28 : f32 to vector<1x64xf32>
    %71 = arith.addf %70, %69 : vector<1x64xf32>
    %72 = arith.divf %70, %71 : vector<1x64xf32>
    %73 = vector.extract_strided_slice %72 {offsets = [0, 0], sizes = [1, 16], strides = [1, 1]} : vector<1x64xf32> to vector<1x16xf32>
    %74 = vector.extract_strided_slice %72 {offsets = [0, 16], sizes = [1, 16], strides = [1, 1]} : vector<1x64xf32> to vector<1x16xf32>
    %75 = vector.extract_strided_slice %72 {offsets = [0, 32], sizes = [1, 16], strides = [1, 1]} : vector<1x64xf32> to vector<1x16xf32>
    %76 = vector.extract_strided_slice %72 {offsets = [0, 48], sizes = [1, 16], strides = [1, 1]} : vector<1x64xf32> to vector<1x16xf32>
    %cst_29 = arith.constant 2.000000e+00 : f32
    %77 = vector.broadcast %cst_29 : f32 to vector<1x16xf32>
    %78 = arith.mulf %77, %76 : vector<1x16xf32>
    %cst_30 = arith.constant 1.000000e+00 : f32
    %79 = vector.broadcast %cst_30 : f32 to vector<1x16xf32>
    %80 = arith.subf %78, %79 : vector<1x16xf32>
    %81 = arith.mulf %74, %62 : vector<1x16xf32>
    %82 = arith.mulf %73, %80 : vector<1x16xf32>
    %83 = arith.addf %81, %82 : vector<1x16xf32>
    %84 = math.tanh %83 : vector<1x16xf32>
    %85 = arith.mulf %75, %84 : vector<1x16xf32>
    %86 = vector.extract_strided_slice %20 {offsets = [3, 0], sizes = [1, 64], strides = [1, 1]} : vector<8x64xf32> to vector<1x64xf32>
    %cst_31 = arith.constant dense<0.000000e+00> : vector<1x64xf32>
    %87 = tpu.matmul %85, %16, %cst_31 {dimension_numbers = #tpu.dot_dimension_numbers<[1], [0], [0], [1], [0, 0, 1, 1], [], []>} : vector<1x16xf32>, vector<16x64xf32>, vector<1x64xf32> -> vector<1x64xf32>
    %88 = arith.addf %86, %87 : vector<1x64xf32>
    %89 = arith.negf %88 : vector<1x64xf32>
    %90 = math.exp %89 : vector<1x64xf32>
    %cst_32 = arith.constant 1.000000e+00 : f32
    %91 = vector.broadcast %cst_32 : f32 to vector<1x64xf32>
    %92 = arith.addf %91, %90 : vector<1x64xf32>
    %93 = arith.divf %91, %92 : vector<1x64xf32>
    %94 = vector.extract_strided_slice %93 {offsets = [0, 0], sizes = [1, 16], strides = [1, 1]} : vector<1x64xf32> to vector<1x16xf32>
    %95 = vector.extract_strided_slice %93 {offsets = [0, 16], sizes = [1, 16], strides = [1, 1]} : vector<1x64xf32> to vector<1x16xf32>
    %96 = vector.extract_strided_slice %93 {offsets = [0, 32], sizes = [1, 16], strides = [1, 1]} : vector<1x64xf32> to vector<1x16xf32>
    %97 = vector.extract_strided_slice %93 {offsets = [0, 48], sizes = [1, 16], strides = [1, 1]} : vector<1x64xf32> to vector<1x16xf32>
    %cst_33 = arith.constant 2.000000e+00 : f32
    %98 = vector.broadcast %cst_33 : f32 to vector<1x16xf32>
    %99 = arith.mulf %98, %97 : vector<1x16xf32>
    %cst_34 = arith.constant 1.000000e+00 : f32
    %100 = vector.broadcast %cst_34 : f32 to vector<1x16xf32>
    %101 = arith.subf %99, %100 : vector<1x16xf32>
    %102 = arith.mulf %95, %83 : vector<1x16xf32>
    %103 = arith.mulf %94, %101 : vector<1x16xf32>
    %104 = arith.addf %102, %103 : vector<1x16xf32>
    %105 = math.tanh %104 : vector<1x16xf32>
    %106 = arith.mulf %96, %105 : vector<1x16xf32>
    %107 = vector.extract_strided_slice %20 {offsets = [4, 0], sizes = [1, 64], strides = [1, 1]} : vector<8x64xf32> to vector<1x64xf32>
    %cst_35 = arith.constant dense<0.000000e+00> : vector<1x64xf32>
    %108 = tpu.matmul %106, %16, %cst_35 {dimension_numbers = #tpu.dot_dimension_numbers<[1], [0], [0], [1], [0, 0, 1, 1], [], []>} : vector<1x16xf32>, vector<16x64xf32>, vector<1x64xf32> -> vector<1x64xf32>
    %109 = arith.addf %107, %108 : vector<1x64xf32>
    %110 = arith.negf %109 : vector<1x64xf32>
    %111 = math.exp %110 : vector<1x64xf32>
    %cst_36 = arith.constant 1.000000e+00 : f32
    %112 = vector.broadcast %cst_36 : f32 to vector<1x64xf32>
    %113 = arith.addf %112, %111 : vector<1x64xf32>
    %114 = arith.divf %112, %113 : vector<1x64xf32>
    %115 = vector.extract_strided_slice %114 {offsets = [0, 0], sizes = [1, 16], strides = [1, 1]} : vector<1x64xf32> to vector<1x16xf32>
    %116 = vector.extract_strided_slice %114 {offsets = [0, 16], sizes = [1, 16], strides = [1, 1]} : vector<1x64xf32> to vector<1x16xf32>
    %117 = vector.extract_strided_slice %114 {offsets = [0, 32], sizes = [1, 16], strides = [1, 1]} : vector<1x64xf32> to vector<1x16xf32>
    %118 = vector.extract_strided_slice %114 {offsets = [0, 48], sizes = [1, 16], strides = [1, 1]} : vector<1x64xf32> to vector<1x16xf32>
    %cst_37 = arith.constant 2.000000e+00 : f32
    %119 = vector.broadcast %cst_37 : f32 to vector<1x16xf32>
    %120 = arith.mulf %119, %118 : vector<1x16xf32>
    %cst_38 = arith.constant 1.000000e+00 : f32
    %121 = vector.broadcast %cst_38 : f32 to vector<1x16xf32>
    %122 = arith.subf %120, %121 : vector<1x16xf32>
    %123 = arith.mulf %116, %104 : vector<1x16xf32>
    %124 = arith.mulf %115, %122 : vector<1x16xf32>
    %125 = arith.addf %123, %124 : vector<1x16xf32>
    %126 = math.tanh %125 : vector<1x16xf32>
    %127 = arith.mulf %117, %126 : vector<1x16xf32>
    %128 = vector.extract_strided_slice %20 {offsets = [5, 0], sizes = [1, 64], strides = [1, 1]} : vector<8x64xf32> to vector<1x64xf32>
    %cst_39 = arith.constant dense<0.000000e+00> : vector<1x64xf32>
    %129 = tpu.matmul %127, %16, %cst_39 {dimension_numbers = #tpu.dot_dimension_numbers<[1], [0], [0], [1], [0, 0, 1, 1], [], []>} : vector<1x16xf32>, vector<16x64xf32>, vector<1x64xf32> -> vector<1x64xf32>
    %130 = arith.addf %128, %129 : vector<1x64xf32>
    %131 = arith.negf %130 : vector<1x64xf32>
    %132 = math.exp %131 : vector<1x64xf32>
    %cst_40 = arith.constant 1.000000e+00 : f32
    %133 = vector.broadcast %cst_40 : f32 to vector<1x64xf32>
    %134 = arith.addf %133, %132 : vector<1x64xf32>
    %135 = arith.divf %133, %134 : vector<1x64xf32>
    %136 = vector.extract_strided_slice %135 {offsets = [0, 0], sizes = [1, 16], strides = [1, 1]} : vector<1x64xf32> to vector<1x16xf32>
    %137 = vector.extract_strided_slice %135 {offsets = [0, 16], sizes = [1, 16], strides = [1, 1]} : vector<1x64xf32> to vector<1x16xf32>
    %138 = vector.extract_strided_slice %135 {offsets = [0, 32], sizes = [1, 16], strides = [1, 1]} : vector<1x64xf32> to vector<1x16xf32>
    %139 = vector.extract_strided_slice %135 {offsets = [0, 48], sizes = [1, 16], strides = [1, 1]} : vector<1x64xf32> to vector<1x16xf32>
    %cst_41 = arith.constant 2.000000e+00 : f32
    %140 = vector.broadcast %cst_41 : f32 to vector<1x16xf32>
    %141 = arith.mulf %140, %139 : vector<1x16xf32>
    %cst_42 = arith.constant 1.000000e+00 : f32
    %142 = vector.broadcast %cst_42 : f32 to vector<1x16xf32>
    %143 = arith.subf %141, %142 : vector<1x16xf32>
    %144 = arith.mulf %137, %125 : vector<1x16xf32>
    %145 = arith.mulf %136, %143 : vector<1x16xf32>
    %146 = arith.addf %144, %145 : vector<1x16xf32>
    %147 = math.tanh %146 : vector<1x16xf32>
    %148 = arith.mulf %138, %147 : vector<1x16xf32>
    %149 = vector.extract_strided_slice %20 {offsets = [6, 0], sizes = [1, 64], strides = [1, 1]} : vector<8x64xf32> to vector<1x64xf32>
    %cst_43 = arith.constant dense<0.000000e+00> : vector<1x64xf32>
    %150 = tpu.matmul %148, %16, %cst_43 {dimension_numbers = #tpu.dot_dimension_numbers<[1], [0], [0], [1], [0, 0, 1, 1], [], []>} : vector<1x16xf32>, vector<16x64xf32>, vector<1x64xf32> -> vector<1x64xf32>
    %151 = arith.addf %149, %150 : vector<1x64xf32>
    %152 = arith.negf %151 : vector<1x64xf32>
    %153 = math.exp %152 : vector<1x64xf32>
    %cst_44 = arith.constant 1.000000e+00 : f32
    %154 = vector.broadcast %cst_44 : f32 to vector<1x64xf32>
    %155 = arith.addf %154, %153 : vector<1x64xf32>
    %156 = arith.divf %154, %155 : vector<1x64xf32>
    %157 = vector.extract_strided_slice %156 {offsets = [0, 0], sizes = [1, 16], strides = [1, 1]} : vector<1x64xf32> to vector<1x16xf32>
    %158 = vector.extract_strided_slice %156 {offsets = [0, 16], sizes = [1, 16], strides = [1, 1]} : vector<1x64xf32> to vector<1x16xf32>
    %159 = vector.extract_strided_slice %156 {offsets = [0, 32], sizes = [1, 16], strides = [1, 1]} : vector<1x64xf32> to vector<1x16xf32>
    %160 = vector.extract_strided_slice %156 {offsets = [0, 48], sizes = [1, 16], strides = [1, 1]} : vector<1x64xf32> to vector<1x16xf32>
    %cst_45 = arith.constant 2.000000e+00 : f32
    %161 = vector.broadcast %cst_45 : f32 to vector<1x16xf32>
    %162 = arith.mulf %161, %160 : vector<1x16xf32>
    %cst_46 = arith.constant 1.000000e+00 : f32
    %163 = vector.broadcast %cst_46 : f32 to vector<1x16xf32>
    %164 = arith.subf %162, %163 : vector<1x16xf32>
    %165 = arith.mulf %158, %146 : vector<1x16xf32>
    %166 = arith.mulf %157, %164 : vector<1x16xf32>
    %167 = arith.addf %165, %166 : vector<1x16xf32>
    %168 = math.tanh %167 : vector<1x16xf32>
    %169 = arith.mulf %159, %168 : vector<1x16xf32>
    %170 = vector.extract_strided_slice %20 {offsets = [7, 0], sizes = [1, 64], strides = [1, 1]} : vector<8x64xf32> to vector<1x64xf32>
    %cst_47 = arith.constant dense<0.000000e+00> : vector<1x64xf32>
    %171 = tpu.matmul %169, %16, %cst_47 {dimension_numbers = #tpu.dot_dimension_numbers<[1], [0], [0], [1], [0, 0, 1, 1], [], []>} : vector<1x16xf32>, vector<16x64xf32>, vector<1x64xf32> -> vector<1x64xf32>
    %172 = arith.addf %170, %171 : vector<1x64xf32>
    %173 = arith.negf %172 : vector<1x64xf32>
    %174 = math.exp %173 : vector<1x64xf32>
    %cst_48 = arith.constant 1.000000e+00 : f32
    %175 = vector.broadcast %cst_48 : f32 to vector<1x64xf32>
    %176 = arith.addf %175, %174 : vector<1x64xf32>
    %177 = arith.divf %175, %176 : vector<1x64xf32>
    %178 = vector.extract_strided_slice %177 {offsets = [0, 0], sizes = [1, 16], strides = [1, 1]} : vector<1x64xf32> to vector<1x16xf32>
    %179 = vector.extract_strided_slice %177 {offsets = [0, 16], sizes = [1, 16], strides = [1, 1]} : vector<1x64xf32> to vector<1x16xf32>
    %180 = vector.extract_strided_slice %177 {offsets = [0, 32], sizes = [1, 16], strides = [1, 1]} : vector<1x64xf32> to vector<1x16xf32>
    %181 = vector.extract_strided_slice %177 {offsets = [0, 48], sizes = [1, 16], strides = [1, 1]} : vector<1x64xf32> to vector<1x16xf32>
    %cst_49 = arith.constant 2.000000e+00 : f32
    %182 = vector.broadcast %cst_49 : f32 to vector<1x16xf32>
    %183 = arith.mulf %182, %181 : vector<1x16xf32>
    %cst_50 = arith.constant 1.000000e+00 : f32
    %184 = vector.broadcast %cst_50 : f32 to vector<1x16xf32>
    %185 = arith.subf %183, %184 : vector<1x16xf32>
    %186 = arith.mulf %179, %167 : vector<1x16xf32>
    %187 = arith.mulf %178, %185 : vector<1x16xf32>
    %188 = arith.addf %186, %187 : vector<1x16xf32>
    %189 = math.tanh %188 : vector<1x16xf32>
    %190 = arith.mulf %180, %189 : vector<1x16xf32>
    %c0_51 = arith.constant 0 : index
    %c0_52 = arith.constant 0 : index
    %191 = vector.load %arg7[%c0_51, %c0_52] : memref<1x16xf32, #tpu.memory_space<vmem>>, vector<1x16xf32>
    tpu.vector_store %arg7[%c0_51, %c0_52], %190 {strides = array<i32>} : memref<1x16xf32, #tpu.memory_space<vmem>>, vector<1x16xf32>,
    %c0_53 = arith.constant 0 : index
    %c0_54 = arith.constant 0 : index
    %192 = vector.load %arg8[%c0_53, %c0_54] : memref<1x16xf32, #tpu.memory_space<vmem>>, vector<1x16xf32>
    tpu.vector_store %arg8[%c0_53, %c0_54], %188 {strides = array<i32>} : memref<1x16xf32, #tpu.memory_space<vmem>>, vector<1x16xf32>,
    %193 = tpu.concatenate %43, %64, %85, %106, %127, %148, %169, %190 in 0 : vector<1x16xf32>, vector<1x16xf32>, vector<1x16xf32>, vector<1x16xf32>, vector<1x16xf32>, vector<1x16xf32>, vector<1x16xf32>, vector<1x16xf32> -> vector<8x16xf32>
    %c0_55 = arith.constant 0 : index
    %c0_56 = arith.constant 0 : index
    %194 = vector.load %arg5[%c0_55, %c0_56] : memref<17x4xf32, #tpu.memory_space<vmem>>, vector<16x4xf32>
    %c16_57 = arith.constant 16 : index
    %c0_58 = arith.constant 0 : index
    %195 = vector.load %arg5[%c16_57, %c0_58] : memref<17x4xf32, #tpu.memory_space<vmem>>, vector<1x4xf32>
    %cst_59 = arith.constant dense<0.000000e+00> : vector<8x4xf32>
    %196 = tpu.matmul %193, %194, %cst_59 {dimension_numbers = #tpu.dot_dimension_numbers<[1], [0], [0], [1], [0, 0, 1, 1], [], []>} : vector<8x16xf32>, vector<16x4xf32>, vector<8x4xf32> -> vector<8x4xf32>
    %197 = vector.broadcast %195 : vector<1x4xf32> to vector<8x4xf32>
    %198 = arith.addf %196, %197 : vector<8x4xf32>
    %c0_60 = arith.constant 0 : index
    %c0_61 = arith.constant 0 : index
    %199 = vector.load %arg6[%c0_60, %c0_61] : memref<8x4xf32, #tpu.memory_space<vmem>>, vector<8x4xf32>
    tpu.vector_store %arg6[%c0_60, %c0_61], %198 {strides = array<i32>} : memref<8x4xf32, #tpu.memory_space<vmem>>, vector<8x4xf32>,
    return
  }
}

</mosaic_0001>

<llo_original>
// kernel: net_forward.1
$region0: #{net_forward.1}
  #allocation0 [shape = 'u32[]', space=smem, size = 0x4, offset = 0x4, fixed_abs, tag = 'smem constant byte address 0x4 - core index']
  #allocation1 [shape = 'u32[72,128]{1,0:T(1,128)}', space=vmem, size = 0x9000, scoped, tag = 'internal scratch']
  %s0 = inlined_call_operand.vmem [shape: f32[8,32], index: 0, kind: input, shape index: {}]
  %s1 = inlined_call_operand.vmem [shape: f32[2,16], index: 1, kind: input, shape index: {}]
  %s2 = inlined_call_operand.vmem [shape: f32[33,256], index: 2, kind: input, shape index: {}]
  %s3 = inlined_call_operand.vmem [shape: f32[257,16], index: 3, kind: input, shape index: {}]
  %s4 = inlined_call_operand.vmem [shape: f32[33,64], index: 4, kind: input, shape index: {}]
  %s5 = inlined_call_operand.vmem [shape: f32[17,4], index: 5, kind: input, shape index: {}]
  %s6 = inlined_call_operand.vmem [shape: f32[8,4], index: 6, kind: output, shape index: {0}]
  %s7 = inlined_call_operand.hbm [shape: f32[1,16], index: 7, kind: output, shape index: {1}]
  %s8 = inlined_call_operand.hbm [shape: f32[1,16], index: 8, kind: output, shape index: {2}]
  %9 = xla_tuple %s6, %s7, %s8
  %s10 = sld [smem:[#allocation0]]
  $region50: #{net_forward.1} parent=0
    _
  %s12 = ssub.s32 1, %s10
  %s13 = scalar_select 0, %s12, %s10
  $region1: #{net_forward.1} parent=0
    #allocation2 [shape = 'u8[512]{0}', space=vmem, size = 0x400, scoped, tag = 'output window, operand 1, single buffered']
    #allocation3 [shape = 's32[1]{0}', space=sflag, size = 0x4, scoped, tag = 'scoped memory for net_forward.1']
    #allocation4 [shape = 'u8[512]{0}', space=vmem, size = 0x400, scoped, tag = 'output window, operand 2, single buffered']
    #allocation5 [shape = 's32[1]{0}', space=sflag, size = 0x4, scoped, tag = 'scoped memory for net_forward.1']
    %14 = vsyncpa [#allocation3], 0
    %15 = vsyncpa [#allocation5], 0
    // Predicated region
    $region2: #{net_forward.1} parent=1 // pred_check
      _
    $region3: #{net_forward.1} parent=1 // pred_check_branch
      %17 = sbr.rel (0) target = $region5
    $region4: #{net_forward.1} parent=1 // pred_region
      _
    $region5: #{net_forward.1} parent=1 // pred_fallthru
      _
    // Predicated region
    $region6: #{net_forward.1} parent=1 // pred_check
      _
    $region7: #{net_forward.1} parent=1 // pred_check_branch
      %19 = sbr.rel (0) target = $region9
    $region8: #{net_forward.1} parent=1 // pred_region
      _
    $region9: #{net_forward.1} parent=1 // pred_fallthru
      _
    // Predicated region
    $region10: #{net_forward.1} parent=1 // pred_check
      _
    $region11: #{net_forward.1} parent=1 // pred_check_branch
      %21 = sbr.rel (0) target = $region13
    $region12: #{net_forward.1} parent=1 // pred_region
      _
    $region13: #{net_forward.1} parent=1 // pred_fallthru
      _
    // Predicated region
    $region14: #{net_forward.1} parent=1 // pred_check
      _
    $region15: #{net_forward.1} parent=1 // pred_check_branch
      %23 = sbr.rel (0) target = $region17
    $region16: #{net_forward.1} parent=1 // pred_region
      _
    $region17: #{net_forward.1} parent=1 // pred_fallthru
      _
    // Predicated region
    $region18: #{net_forward.1} parent=1 // pred_check
      _
    $region19: #{net_forward.1} parent=1 // pred_check_branch
      %25 = sbr.rel (0) target = $region21
    $region20: #{net_forward.1} parent=1 // pred_region
      _
    $region21: #{net_forward.1} parent=1 // pred_fallthru
      _
    // Predicated region
    $region22: #{net_forward.1} parent=1 // pred_check
      _
    $region23: #{net_forward.1} parent=1 // pred_check_branch
      %27 = sbr.rel (0) target = $region25
    $region24: #{net_forward.1} parent=1 // pred_region
      _
    $region25: #{net_forward.1} parent=1 // pred_fallthru
      _
    %v28 = vld [vmem:[%s0] sm:$0xff]
    %v29 = vld [vmem:[%s2] sm:$0xff]
    %v30 = vld [vmem:[%s2 + $0x8] sm:$0xff]
    %v31 = vld [vmem:[%s2 + $0x10] sm:$0xff]
    %v32 = vld [vmem:[%s2 + $0x18] sm:$0xff]
    %v33 = vld [vmem:[%s2 + $0x20] sm:$0xff]
    %v34 = vld [vmem:[%s2 + $0x28] sm:$0xff]
    %v35 = vld [vmem:[%s2 + $0x30] sm:$0xff]
    %v36 = vld [vmem:[%s2 + $0x38] sm:$0xff]
    %s37 = scalar_lea.vmem %s2, 64
    %v38 = vld [vmem:[%s37] ss:$8 sm:$0x3]
    %v40 = vperm.slane %v38, 0
    %v41 = vperm.slane %v38, 1
    %vm44 = vcmask 261120
    %v46 = vsel %vm44, %v28, 0
    %48 = vmatpush.msra.mxu0 0.0
    %49 = vmatpush.msra.mxu0 0.0
    %50 = vmatpush.msra.mxu0 0.0
    %51 = vmatpush.msra.mxu0 0.0
    %52 = vmatpush.msra.mxu0 0.0
    %53 = vmatpush.msra.mxu0 0.0
    %54 = vmatpush.msra.mxu0 0.0
    %55 = vmatpush.msra.mxu0 0.0
    %56 = vmatpush.msra.mxu0 0.0
    %57 = vmatpush.msra.mxu0 0.0
    %58 = vmatpush.msra.mxu0 0.0
    %59 = vmatpush.msra.mxu0 0.0
    %60 = vmatpush.msra.mxu0 %v35
    %61 = vmatpush.msra.mxu0 %v33
    %62 = vmatpush.msra.mxu0 %v31
    %63 = vmatpush.msra.mxu0 %v29
    %64 = vmatmul.f32.gmra.mxu0 %v46
    %v65 = vpop.f32.mrf.mxu0
    %v66 = vadd.f32 %v40, %v65
    %67 = vdwg.mxu0
    %68 = vmatpush.msra.mxu0 0.0
    %69 = vmatpush.msra.mxu0 0.0
    %70 = vmatpush.msra.mxu0 0.0
    %71 = vmatpush.msra.mxu0 0.0
    %72 = vmatpush.msra.mxu0 0.0
    %73 = vmatpush.msra.mxu0 0.0
    %74 = vmatpush.msra.mxu0 0.0
    %75 = vmatpush.msra.mxu0 0.0
    %76 = vmatpush.msra.mxu0 0.0
    %77 = vmatpush.msra.mxu0 0.0
    %78 = vmatpush.msra.mxu0 0.0
    %79 = vmatpush.msra.mxu0 0.0
    %80 = vmatpush.msra.mxu0 %v36
    %81 = vmatpush.msra.mxu0 %v34
    %82 = vmatpush.msra.mxu0 %v32
    %83 = vmatpush.msra.mxu0 %v30
    %84 = vmatmul.f32.gmra.mxu0 %v46
    %v85 = vpop.f32.mrf.mxu0
    %v86 = vadd.f32 %v41, %v85
    %87 = vdwg.mxu0
    %v88 = vmax.f32 %v66, 0.0
    %v89 = vmax.f32 %v86, 0.0
    %v90 = vld [vmem:[%s3] sm:$0xff]
    %v91 = vld [vmem:[%s3 + $0x8] sm:$0xff]
    %v92 = vld [vmem:[%s3 + $0x10] sm:$0xff]
    %v93 = vld [vmem:[%s3 + $0x18] sm:$0xff]
    %v94 = vld [vmem:[%s3 + $0x20] sm:$0xff]
    %v95 = vld [vmem:[%s3 + $0x28] sm:$0xff]
    %v96 = vld [vmem:[%s3 + $0x30] sm:$0xff]
    %v97 = vld [vmem:[%s3 + $0x38] sm:$0xff]
    %v98 = vld [vmem:[%s3 + $0x40] sm:$0xff]
    %v99 = vld [vmem:[%s3 + $0x48] sm:$0xff]
    %v100 = vld [vmem:[%s3 + $0x50] sm:$0xff]
    %v101 = vld [vmem:[%s3 + $0x58] sm:$0xff]
    %v102 = vld [vmem:[%s3 + $0x60] sm:$0xff]
    %v103 = vld [vmem:[%s3 + $0x68] sm:$0xff]
    %v104 = vld [vmem:[%s3 + $0x70] sm:$0xff]
    %v105 = vld [vmem:[%s3 + $0x78] sm:$0xff]
    %v106 = vld [vmem:[%s3 + $0x80] sm:$0xff]
    %v107 = vld [vmem:[%s3 + $0x88] sm:$0xff]
    %v108 = vld [vmem:[%s3 + $0x90] sm:$0xff]
    %v109 = vld [vmem:[%s3 + $0x98] sm:$0xff]
    %v110 = vld [vmem:[%s3 + $0xa0] sm:$0xff]
    %v111 = vld [vmem:[%s3 + $0xa8] sm:$0xff]
    %v112 = vld [vmem:[%s3 + $0xb0] sm:$0xff]
    %v113 = vld [vmem:[%s3 + $0xb8] sm:$0xff]
    %v114 = vld [vmem:[%s3 + $0xc0] sm:$0xff]
    %v115 = vld [vmem:[%s3 + $0xc8] sm:$0xff]
    %v116 = vld [vmem:[%s3 + $0xd0] sm:$0xff]
    %v117 = vld [vmem:[%s3 + $0xd8] sm:$0xff]
    %v118 = vld [vmem:[%s3 + $0xe0] sm:$0xff]
    %v119 = vld [vmem:[%s3 + $0xe8] sm:$0xff]
    %v120 = vld [vmem:[%s3 + $0xf0] sm:$0xff]
    %v121 = vld [vmem:[%s3 + $0xf8] sm:$0xff]
    %v122 = vld [vmem:[%s3 + $0x100] sm:$0x1]
    %v123 = vperm.slane %v122, 0
    %124 = vmatpush.msra.mxu0 %v105
    %125 = vmatpush.msra.mxu0 %v104
    %126 = vmatpush.msra.mxu0 %v103
    %127 = vmatpush.msra.mxu0 %v102
    %128 = vmatpush.msra.mxu0 %v101
    %129 = vmatpush.msra.mxu0 %v100
    %130 = vmatpush.msra.mxu0 %v99
    %131 = vmatpush.msra.mxu0 %v98
    %132 = vmatpush.msra.mxu0 %v97
    %133 = vmatpush.msra.mxu0 %v96
    %134 = vmatpush.msra.mxu0 %v95
    %135 = vmatpush.msra.mxu0 %v94
    %136 = vmatpush.msra.mxu0 %v93
    %137 = vmatpush.msra.mxu0 %v92
    %138 = vmatpush.msra.mxu0 %v91
    %139 = vmatpush.msra.mxu0 %v90
    %140 = vmatmul.f32.gmra.mxu0 %v88
    %v141 = vpop.f32.mrf.mxu0
    %v142 = vadd.f32 %v123, %v141
    %143 = vdwg.mxu0
    %144 = vmatpush.msra.mxu0 %v121
    %145 = vmatpush.msra.mxu0 %v120
    %146 = vmatpush.msra.mxu0 %v119
    %147 = vmatpush.msra.mxu0 %v118
    %148 = vmatpush.msra.mxu0 %v117
    %149 = vmatpush.msra.mxu0 %v116
    %150 = vmatpush.msra.mxu0 %v115
    %151 = vmatpush.msra.mxu0 %v114
    %152 = vmatpush.msra.mxu0 %v113
    %153 = vmatpush.msra.mxu0 %v112
    %154 = vmatpush.msra.mxu0 %v111
    %155 = vmatpush.msra.mxu0 %v110
    %156 = vmatpush.msra.mxu0 %v109
    %157 = vmatpush.msra.mxu0 %v108
    %158 = vmatpush.msra.mxu0 %v107
    %159 = vmatpush.msra.mxu0 %v106
    %160 = vmatmul.f32.gmra.mxu0 %v89
    %v161 = vpop.f32.mrf.mxu0
    %v162 = vadd.f32 %v142, %v161
    %163 = vdwg.mxu0
    %v164 = vmax.f32 %v162, 0.0
    %v165 = vld [vmem:[%s4] sm:$0xff]
    %v166 = vld [vmem:[%s4 + $0x8] sm:$0xff]
    %v167 = vld [vmem:[%s4 + $0x10] sm:$0xff]
    %v168 = vld [vmem:[%s4 + $0x18] sm:$0xff]
    %v169 = vld [vmem:[%s4 + $0x20] sm:$0x1]
    %v170 = vperm.slane %v169, 0
    %vm171 = vcmask 130048
    %v173 = vsel %vm171, %v164, 0
    %175 = vmatpush.msra.mxu0 0.0
    %176 = vmatpush.msra.mxu0 0.0
    %177 = vmatpush.msra.mxu0 0.0
    %178 = vmatpush.msra.mxu0 0.0
    %179 = vmatpush.msra.mxu0 0.0
    %180 = vmatpush.msra.mxu0 0.0
    %181 = vmatpush.msra.mxu0 0.0
    %182 = vmatpush.msra.mxu0 0.0
    %183 = vmatpush.msra.mxu0 0.0
    %184 = vmatpush.msra.mxu0 0.0
    %185 = vmatpush.msra.mxu0 0.0
    %186 = vmatpush.msra.mxu0 0.0
    %187 = vmatpush.msra.mxu0 0.0
    %188 = vmatpush.msra.mxu0 0.0
    %189 = vmatpush.msra.mxu0 %v166
    %190 = vmatpush.msra.mxu0 %v165
    %191 = vmatmul.f32.gmra.mxu0 %v173
    %v192 = vpop.f32.mrf.mxu0
    %v193 = vadd.f32 %v170, %v192
    %194 = vdwg.mxu0
    %v195 = vld [vmem:[%s1] sm:$0x1]
    %v196 = vld [vmem:[%s1 + $0x1] sm:$0x1]
    %v198 = vsel %vm171, %v195, 0
    %200 = vmatpush.msra.mxu0 0.0
    %201 = vmatpush.msra.mxu0 0.0
    %202 = vmatpush.msra.mxu0 0.0
    %203 = vmatpush.msra.mxu0 0.0
    %204 = vmatpush.msra.mxu0 0.0
    %205 = vmatpush.msra.mxu0 0.0
    %206 = vmatpush.msra.mxu0 0.0
    %207 = vmatpush.msra.mxu0 0.0
    %208 = vmatpush.msra.mxu0 0.0
    %209 = vmatpush.msra.mxu0 0.0
    %210 = vmatpush.msra.mxu0 0.0
    %211 = vmatpush.msra.mxu0 0.0
    %212 = vmatpush.msra.mxu0 0.0
    %213 = vmatpush.msra.mxu0 0.0
    %214 = vmatpush.msra.mxu0 %v168
    %215 = vmatpush.msra.mxu0 %v167
    %216 = vmatmul.f32.gmra.mxu0 %v198
    %v217 = vpop.f32.mrf.mxu0
    %v218 = vadd.f32 0.0, %v217
    %219 = vdwg.mxu0
    %v220 = vadd.f32 %v193, %v218
    %v221 = vxor.u32 %v220, 2147483648
    %v222 = vmul.f32 %v221, 1.442695
    %v223 = vpow.pop %v222
    %v224 = vadd.f32 %v223, 1.0
    %v225 = vrcp.pop %v224
    %v226 = vmul.f32 %v224, %v225
    %v227 = vsub.f32 1.0, %v226
    %v228 = vmul.f32 %v225, %v227
    %v229 = vadd.f32 %v225, %v228
    %vm230 = vweird.f32 %v224
    %vm231 = vweird.f32 %v225
    %vm232 = vmor %vm230, %vm231
    %v233 = vsel %vm232, %v225, %v229
    %v234 = vand.u32 2147483647, %v224
    %vm235 = vcmp.eq.f32.partialorder %v234, 8.507059e+37
    %v236 = vand.u32 %v224, 2147483648
    %v237 = vor.u32 1.1754944e-38, %v236
    %v238 = vsel %vm235, %v237, %v233
    %v239 = vmul.f32 1.0, %v238
    %v240 = vmul.f32 %v239, 2.0
    %v241 = vsub.f32 %v240, 1.0
    %243 = vrot.lane.b32.xlu0 %v196, 16
    %v244 = vpop.permute.xlu0 %243
    %v246 = vmul.f32 %v239, %v244
    %248 = vrot.lane.b32.xlu0 %v241, 80
    %v249 = vpop.permute.xlu0 %248
    %v251 = vmul.f32 %v239, %v249
    %253 = vrot.lane.b32.xlu0 %v251, 16
    %v254 = vpop.permute.xlu0 %253
    %v256 = vadd.f32 %v246, %v254
    %v257 = vtanh.pop %v256
    %259 = vrot.lane.b32.xlu0 %v257, 16
    %v260 = vpop.permute.xlu0 %259
    %v262 = vmul.f32 %v239, %v260
    %264 = vrot.lane.b32.xlu0 %v262, 96
    %v265 = vpop.permute.xlu0 %264
    %v266 = vsel %vm171, %v265, 0
    %268 = vmatpush.msra.mxu0 0.0
    %269 = vmatpush.msra.mxu0 0.0
    %270 = vmatpush.msra.mxu0 0.0
    %271 = vmatpush.msra.mxu0 0.0
    %272 = vmatpush.msra.mxu0 0.0
    %273 = vmatpush.msra.mxu0 0.0
    %274 = vmatpush.msra.mxu0 0.0
    %275 = vmatpush.msra.mxu0 0.0
    %276 = vmatpush.msra.mxu0 0.0
    %277 = vmatpush.msra.mxu0 0.0
    %278 = vmatpush.msra.mxu0 0.0
    %279 = vmatpush.msra.mxu0 0.0
    %280 = vmatpush.msra.mxu0 0.0
    %281 = vmatpush.msra.mxu0 0.0
    %282 = vmatpush.msra.mxu0 %v168
    %283 = vmatpush.msra.mxu0 %v167
    %284 = vmatmul.f32.gmra.mxu0 %v266
    %v285 = vpop.f32.mrf.mxu0
    %v286 = vadd.f32 0.0, %v285
    %287 = vdwg.mxu0
    %v289 = vrot.slane %v286, 7
    %v291 = vadd.f32 %v193, %v289
    %v292 = vxor.u32 %v291, 2147483648
    %v293 = vmul.f32 %v292, 1.442695
    %v294 = vpow.pop %v293
    %v295 = vadd.f32 %v294, 1.0
    %v296 = vrcp.pop %v295
    %v297 = vmul.f32 %v295, %v296
    %v298 = vsub.f32 1.0, %v297
    %v299 = vmul.f32 %v296, %v298
    %v300 = vadd.f32 %v296, %v299
    %vm301 = vweird.f32 %v295
    %vm302 = vweird.f32 %v296
    %vm303 = vmor %vm301, %vm302
    %v304 = vsel %vm303, %v296, %v300
    %v305 = vand.u32 2147483647, %v295
    %vm306 = vcmp.eq.f32.partialorder %v305, 8.507059e+37
    %v307 = vand.u32 %v295, 2147483648
    %v308 = vor.u32 1.1754944e-38, %v307
    %v309 = vsel %vm306, %v308, %v304
    %v310 = vmul.f32 1.0, %v309
    %v311 = vmul.f32 %v310, 2.0
    %v312 = vsub.f32 %v311, 1.0
    %v314 = vrot.slane %v256, 7
    %v316 = vmul.f32 %v310, %v314
    %318 = vrot.lane.b32.xlu0 %v312, 80
    %v319 = vpop.permute.xlu0 %318
    %v321 = vmul.f32 %v310, %v319
    %323 = vrot.lane.b32.xlu0 %v321, 16
    %v324 = vpop.permute.xlu0 %323
    %v326 = vadd.f32 %v316, %v324
    %v327 = vtanh.pop %v326
    %329 = vrot.lane.b32.xlu0 %v327, 16
    %v330 = vpop.permute.xlu0 %329
    %v332 = vmul.f32 %v310, %v330
    %v334 = vrot.slane %v332, 1
    %335 = vrot.lane.b32.xlu0 %v334, 96
    %v336 = vpop.permute.xlu0 %335
    %v337 = vsel %vm171, %v336, 0
    %339 = vmatpush.msra.mxu0 0.0
    %340 = vmatpush.msra.mxu0 0.0
    %341 = vmatpush.msra.mxu0 0.0
    %342 = vmatpush.msra.mxu0 0.0
    %343 = vmatpush.msra.mxu0 0.0
    %344 = vmatpush.msra.mxu0 0.0
    %345 = vmatpush.msra.mxu0 0.0
    %346 = vmatpush.msra.mxu0 0.0
    %347 = vmatpush.msra.mxu0 0.0
    %348 = vmatpush.msra.mxu0 0.0
    %349 = vmatpush.msra.mxu0 0.0
    %350 = vmatpush.msra.mxu0 0.0
    %351 = vmatpush.msra.mxu0 0.0
    %352 = vmatpush.msra.mxu0 0.0
    %353 = vmatpush.msra.mxu0 %v168
    %354 = vmatpush.msra.mxu0 %v167
    %355 = vmatmul.f32.gmra.mxu0 %v337
    %v356 = vpop.f32.mrf.mxu0
    %v357 = vadd.f32 0.0, %v356
    %358 = vdwg.mxu0
    %v360 = vrot.slane %v357, 6
    %v362 = vadd.f32 %v193, %v360
    %v363 = vxor.u32 %v362, 2147483648
    %v364 = vmul.f32 %v363, 1.442695
    %v365 = vpow.pop %v364
    %v366 = vadd.f32 %v365, 1.0
    %v367 = vrcp.pop %v366
    %v368 = vmul.f32 %v366, %v367
    %v369 = vsub.f32 1.0, %v368
    %v370 = vmul.f32 %v367, %v369
    %v371 = vadd.f32 %v367, %v370
    %vm372 = vweird.f32 %v366
    %vm373 = vweird.f32 %v367
    %vm374 = vmor %vm372, %vm373
    %v375 = vsel %vm374, %v367, %v371
    %v376 = vand.u32 2147483647, %v366
    %vm377 = vcmp.eq.f32.partialorder %v376, 8.507059e+37
    %v378 = vand.u32 %v366, 2147483648
    %v379 = vor.u32 1.1754944e-38, %v378
    %v380 = vsel %vm377, %v379, %v375
    %v381 = vmul.f32 1.0, %v380
    %v382 = vmul.f32 %v381, 2.0
    %v383 = vsub.f32 %v382, 1.0
    %v385 = vrot.slane %v326, 7
    %v387 = vmul.f32 %v381, %v385
    %389 = vrot.lane.b32.xlu0 %v383, 80
    %v390 = vpop.permute.xlu0 %389
    %v392 = vmul.f32 %v381, %v390
    %394 = vrot.lane.b32.xlu0 %v392, 16
    %v395 = vpop.permute.xlu0 %394
    %v397 = vadd.f32 %v387, %v395
    %v398 = vtanh.pop %v397
    %400 = vrot.lane.b32.xlu0 %v398, 16
    %v401 = vpop.permute.xlu0 %400
    %v403 = vmul.f32 %v381, %v401
    %v405 = vrot.slane %v403, 2
    %406 = vrot.lane.b32.xlu0 %v405, 96
    %v407 = vpop.permute.xlu0 %406
    %v408 = vsel %vm171, %v407, 0
    %410 = vmatpush.msra.mxu0 0.0
    %411 = vmatpush.msra.mxu0 0.0
    %412 = vmatpush.msra.mxu0 0.0
    %413 = vmatpush.msra.mxu0 0.0
    %414 = vmatpush.msra.mxu0 0.0
    %415 = vmatpush.msra.mxu0 0.0
    %416 = vmatpush.msra.mxu0 0.0
    %417 = vmatpush.msra.mxu0 0.0
    %418 = vmatpush.msra.mxu0 0.0
    %419 = vmatpush.msra.mxu0 0.0
    %420 = vmatpush.msra.mxu0 0.0
    %421 = vmatpush.msra.mxu0 0.0
    %422 = vmatpush.msra.mxu0 0.0
    %423 = vmatpush.msra.mxu0 0.0
    %424 = vmatpush.msra.mxu0 %v168
    %425 = vmatpush.msra.mxu0 %v167
    %426 = vmatmul.f32.gmra.mxu0 %v408
    %v427 = vpop.f32.mrf.mxu0
    %v428 = vadd.f32 0.0, %v427
    %429 = vdwg.mxu0
    %v431 = vrot.slane %v428, 5
    %v433 = vadd.f32 %v193, %v431
    %v434 = vxor.u32 %v433, 2147483648
    %v435 = vmul.f32 %v434, 1.442695
    %v436 = vpow.pop %v435
    %v437 = vadd.f32 %v436, 1.0
    %v438 = vrcp.pop %v437
    %v439 = vmul.f32 %v437, %v438
    %v440 = vsub.f32 1.0, %v439
    %v441 = vmul.f32 %v438, %v440
    %v442 = vadd.f32 %v438, %v441
    %vm443 = vweird.f32 %v437
    %vm444 = vweird.f32 %v438
    %vm445 = vmor %vm443, %vm444
    %v446 = vsel %vm445, %v438, %v442
    %v447 = vand.u32 2147483647, %v437
    %vm448 = vcmp.eq.f32.partialorder %v447, 8.507059e+37
    %v449 = vand.u32 %v437, 2147483648
    %v450 = vor.u32 1.1754944e-38, %v449
    %v451 = vsel %vm448, %v450, %v446
    %v452 = vmul.f32 1.0, %v451
    %v453 = vmul.f32 %v452, 2.0
    %v454 = vsub.f32 %v453, 1.0
    %v456 = vrot.slane %v397, 7
    %v458 = vmul.f32 %v452, %v456
    %460 = vrot.lane.b32.xlu0 %v454, 80
    %v461 = vpop.permute.xlu0 %460
    %v463 = vmul.f32 %v452, %v461
    %465 = vrot.lane.b32.xlu0 %v463, 16
    %v466 = vpop.permute.xlu0 %465
    %v468 = vadd.f32 %v458, %v466
    %v469 = vtanh.pop %v468
    %471 = vrot.lane.b32.xlu0 %v469, 16
    %v472 = vpop.permute.xlu0 %471
    %v474 = vmul.f32 %v452, %v472
    %v476 = vrot.slane %v474, 3
    %477 = vrot.lane.b32.xlu0 %v476, 96
    %v478 = vpop.permute.xlu0 %477
    %v479 = vsel %vm171, %v478, 0
    %481 = vmatpush.msra.mxu0 0.0
    %482 = vmatpush.msra.mxu0 0.0
    %483 = vmatpush.msra.mxu0 0.0
    %484 = vmatpush.msra.mxu0 0.0
    %485 = vmatpush.msra.mxu0 0.0
    %486 = vmatpush.msra.mxu0 0.0
    %487 = vmatpush.msra.mxu0 0.0
    %488 = vmatpush.msra.mxu0 0.0
    %489 = vmatpush.msra.mxu0 0.0
    %490 = vmatpush.msra.mxu0 0.0
    %491 = vmatpush.msra.mxu0 0.0
    %492 = vmatpush.msra.mxu0 0.0
    %493 = vmatpush.msra.mxu0 0.0
    %494 = vmatpush.msra.mxu0 0.0
    %495 = vmatpush.msra.mxu0 %v168
    %496 = vmatpush.msra.mxu0 %v167
    %497 = vmatmul.f32.gmra.mxu0 %v479
    %v498 = vpop.f32.mrf.mxu0
    %v499 = vadd.f32 0.0, %v498
    %500 = vdwg.mxu0
    %v502 = vrot.slane %v499, 4
    %v504 = vadd.f32 %v193, %v502
    %v505 = vxor.u32 %v504, 2147483648
    %v506 = vmul.f32 %v505, 1.442695
    %v507 = vpow.pop %v506
    %v508 = vadd.f32 %v507, 1.0
    %v509 = vrcp.pop %v508
    %v510 = vmul.f32 %v508, %v509
    %v511 = vsub.f32 1.0, %v510
    %v512 = vmul.f32 %v509, %v511
    %v513 = vadd.f32 %v509, %v512
    %vm514 = vweird.f32 %v508
    %vm515 = vweird.f32 %v509
    %vm516 = vmor %vm514, %vm515
    %v517 = vsel %vm516, %v509, %v513
    %v518 = vand.u32 2147483647, %v508
    %vm519 = vcmp.eq.f32.partialorder %v518, 8.507059e+37
    %v520 = vand.u32 %v508, 2147483648
    %v521 = vor.u32 1.1754944e-38, %v520
    %v522 = vsel %vm519, %v521, %v517
    %v523 = vmul.f32 1.0, %v522
    %v524 = vmul.f32 %v523, 2.0
    %v525 = vsub.f32 %v524, 1.0
    %v527 = vrot.slane %v468, 7
    %v529 = vmul.f32 %v523, %v527
    %531 = vrot.lane.b32.xlu0 %v525, 80
    %v532 = vpop.permute.xlu0 %531
    %v534 = vmul.f32 %v523, %v532
    %536 = vrot.lane.b32.xlu0 %v534, 16
    %v537 = vpop.permute.xlu0 %536
    %v539 = vadd.f32 %v529, %v537
    %v540 = vtanh.pop %v539
    %542 = vrot.lane.b32.xlu0 %v540, 16
    %v543 = vpop.permute.xlu0 %542
    %v545 = vmul.f32 %v523, %v543
    %v547 = vrot.slane %v545, 4
    %548 = vrot.lane.b32.xlu0 %v547, 96
    %v549 = vpop.permute.xlu0 %548
    %v550 = vsel %vm171, %v549, 0
    %552 = vmatpush.msra.mxu0 0.0
    %553 = vmatpush.msra.mxu0 0.0
    %554 = vmatpush.msra.mxu0 0.0
    %555 = vmatpush.msra.mxu0 0.0
    %556 = vmatpush.msra.mxu0 0.0
    %557 = vmatpush.msra.mxu0 0.0
    %558 = vmatpush.msra.mxu0 0.0
    %559 = vmatpush.msra.mxu0 0.0
    %560 = vmatpush.msra.mxu0 0.0
    %561 = vmatpush.msra.mxu0 0.0
    %562 = vmatpush.msra.mxu0 0.0
    %563 = vmatpush.msra.mxu0 0.0
    %564 = vmatpush.msra.mxu0 0.0
    %565 = vmatpush.msra.mxu0 0.0
    %566 = vmatpush.msra.mxu0 %v168
    %567 = vmatpush.msra.mxu0 %v167
    %568 = vmatmul.f32.gmra.mxu0 %v550
    %v569 = vpop.f32.mrf.mxu0
    %v570 = vadd.f32 0.0, %v569
    %571 = vdwg.mxu0
    %v573 = vrot.slane %v570, 3
    %v575 = vadd.f32 %v193, %v573
    %v576 = vxor.u32 %v575, 2147483648
    %v577 = vmul.f32 %v576, 1.442695
    %v578 = vpow.pop %v577
    %v579 = vadd.f32 %v578, 1.0
    %v580 = vrcp.pop %v579
    %v581 = vmul.f32 %v579, %v580
    %v582 = vsub.f32 1.0, %v581
    %v583 = vmul.f32 %v580, %v582
    %v584 = vadd.f32 %v580, %v583
    %vm585 = vweird.f32 %v579
    %vm586 = vweird.f32 %v580
    %vm587 = vmor %vm585, %vm586
    %v588 = vsel %vm587, %v580, %v584
    %v589 = vand.u32 2147483647, %v579
    %vm590 = vcmp.eq.f32.partialorder %v589, 8.507059e+37
    %v591 = vand.u32 %v579, 2147483648
    %v592 = vor.u32 1.1754944e-38, %v591
    %v593 = vsel %vm590, %v592, %v588
    %v594 = vmul.f32 1.0, %v593
    %v595 = vmul.f32 %v594, 2.0
    %v596 = vsub.f32 %v595, 1.0
    %v598 = vrot.slane %v539, 7
    %v600 = vmul.f32 %v594, %v598
    %602 = vrot.lane.b32.xlu0 %v596, 80
    %v603 = vpop.permute.xlu0 %602
    %v605 = vmul.f32 %v594, %v603
    %607 = vrot.lane.b32.xlu0 %v605, 16
    %v608 = vpop.permute.xlu0 %607
    %v610 = vadd.f32 %v600, %v608
    %v611 = vtanh.pop %v610
    %613 = vrot.lane.b32.xlu0 %v611, 16
    %v614 = vpop.permute.xlu0 %613
    %v616 = vmul.f32 %v594, %v614
    %v618 = vrot.slane %v616, 5
    %619 = vrot.lane.b32.xlu0 %v618, 96
    %v620 = vpop.permute.xlu0 %619
    %v621 = vsel %vm171, %v620, 0
    %623 = vmatpush.msra.mxu0 0.0
    %624 = vmatpush.msra.mxu0 0.0
    %625 = vmatpush.msra.mxu0 0.0
    %626 = vmatpush.msra.mxu0 0.0
    %627 = vmatpush.msra.mxu0 0.0
    %628 = vmatpush.msra.mxu0 0.0
    %629 = vmatpush.msra.mxu0 0.0
    %630 = vmatpush.msra.mxu0 0.0
    %631 = vmatpush.msra.mxu0 0.0
    %632 = vmatpush.msra.mxu0 0.0
    %633 = vmatpush.msra.mxu0 0.0
    %634 = vmatpush.msra.mxu0 0.0
    %635 = vmatpush.msra.mxu0 0.0
    %636 = vmatpush.msra.mxu0 0.0
    %637 = vmatpush.msra.mxu0 %v168
    %638 = vmatpush.msra.mxu0 %v167
    %639 = vmatmul.f32.gmra.mxu0 %v621
    %v640 = vpop.f32.mrf.mxu0
    %v641 = vadd.f32 0.0, %v640
    %642 = vdwg.mxu0
    %v644 = vrot.slane %v641, 2
    %v646 = vadd.f32 %v193, %v644
    %v647 = vxor.u32 %v646, 2147483648
    %v648 = vmul.f32 %v647, 1.442695
    %v649 = vpow.pop %v648
    %v650 = vadd.f32 %v649, 1.0
    %v651 = vrcp.pop %v650
    %v652 = vmul.f32 %v650, %v651
    %v653 = vsub.f32 1.0, %v652
    %v654 = vmul.f32 %v651, %v653
    %v655 = vadd.f32 %v651, %v654
    %vm656 = vweird.f32 %v650
    %vm657 = vweird.f32 %v651
    %vm658 = vmor %vm656, %vm657
    %v659 = vsel %vm658, %v651, %v655
    %v660 = vand.u32 2147483647, %v650
    %vm661 = vcmp.eq.f32.partialorder %v660, 8.507059e+37
    %v662 = vand.u32 %v650, 2147483648
    %v663 = vor.u32 1.1754944e-38, %v662
    %v664 = vsel %vm661, %v663, %v659
    %v665 = vmul.f32 1.0, %v664
    %v666 = vmul.f32 %v665, 2.0
    %v667 = vsub.f32 %v666, 1.0
    %v669 = vrot.slane %v610, 7
    %v671 = vmul.f32 %v665, %v669
    %673 = vrot.lane.b32.xlu0 %v667, 80
    %v674 = vpop.permute.xlu0 %673
    %v676 = vmul.f32 %v665, %v674
    %678 = vrot.lane.b32.xlu0 %v676, 16
    %v679 = vpop.permute.xlu0 %678
    %v681 = vadd.f32 %v671, %v679
    %v682 = vtanh.pop %v681
    %684 = vrot.lane.b32.xlu0 %v682, 16
    %v685 = vpop.permute.xlu0 %684
    %v687 = vmul.f32 %v665, %v685
    %v689 = vrot.slane %v687, 6
    %690 = vrot.lane.b32.xlu0 %v689, 96
    %v691 = vpop.permute.xlu0 %690
    %v692 = vsel %vm171, %v691, 0
    %694 = vmatpush.msra.mxu0 0.0
    %695 = vmatpush.msra.mxu0 0.0
    %696 = vmatpush.msra.mxu0 0.0
    %697 = vmatpush.msra.mxu0 0.0
    %698 = vmatpush.msra.mxu0 0.0
    %699 = vmatpush.msra.mxu0 0.0
    %700 = vmatpush.msra.mxu0 0.0
    %701 = vmatpush.msra.mxu0 0.0
    %702 = vmatpush.msra.mxu0 0.0
    %703 = vmatpush.msra.mxu0 0.0
    %704 = vmatpush.msra.mxu0 0.0
    %705 = vmatpush.msra.mxu0 0.0
    %706 = vmatpush.msra.mxu0 0.0
    %707 = vmatpush.msra.mxu0 0.0
    %708 = vmatpush.msra.mxu0 %v168
    %709 = vmatpush.msra.mxu0 %v167
    %710 = vmatmul.f32.gmra.mxu0 %v692
    %v711 = vpop.f32.mrf.mxu0
    %v712 = vadd.f32 0.0, %v711
    %713 = vdwg.mxu0
    %v715 = vrot.slane %v712, 1
    %v717 = vadd.f32 %v193, %v715
    %v718 = vxor.u32 %v717, 2147483648
    %v719 = vmul.f32 %v718, 1.442695
    %v720 = vpow.pop %v719
    %v721 = vadd.f32 %v720, 1.0
    %v722 = vrcp.pop %v721
    %v723 = vmul.f32 %v721, %v722
    %v724 = vsub.f32 1.0, %v723
    %v725 = vmul.f32 %v722, %v724
    %v726 = vadd.f32 %v722, %v725
    %vm727 = vweird.f32 %v721
    %vm728 = vweird.f32 %v722
    %vm729 = vmor %vm727, %vm728
    %v730 = vsel %vm729, %v722, %v726
    %v731 = vand.u32 2147483647, %v721
    %vm732 = vcmp.eq.f32.partialorder %v731, 8.507059e+37
    %v733 = vand.u32 %v721, 2147483648
    %v734 = vor.u32 1.1754944e-38, %v733
    %v735 = vsel %vm732, %v734, %v730
    %v736 = vmul.f32 1.0, %v735
    %v737 = vmul.f32 %v736, 2.0
    %v738 = vsub.f32 %v737, 1.0
    %v740 = vrot.slane %v681, 7
    %v742 = vmul.f32 %v736, %v740
    %744 = vrot.lane.b32.xlu0 %v738, 80
    %v745 = vpop.permute.xlu0 %744
    %v747 = vmul.f32 %v736, %v745
    %749 = vrot.lane.b32.xlu0 %v747, 16
    %v750 = vpop.permute.xlu0 %749
    %v752 = vadd.f32 %v742, %v750
    %v753 = vtanh.pop %v752
    %755 = vrot.lane.b32.xlu0 %v753, 16
    %v756 = vpop.permute.xlu0 %755
    %v758 = vmul.f32 %v736, %v756
    %760 = vrot.lane.b32.xlu0 %v758, 96
    %v761 = vpop.permute.xlu0 %760
    %vm763 = vcmask 130055
    %764 = vst.msk [vmem:[#allocation2 - $0x7] sm:$0x80] %vm763, %v761
    %766 = vrot.lane.b32.xlu0 %v752, 112
    %v767 = vpop.permute.xlu0 %766
    %769 = vst.msk [vmem:[#allocation4 - $0x7] sm:$0x80] %vm763, %v767
    %vm770 = vcmask 1040384
    %v771 = vsel %vm770, %v262, %v332
    %vm772 = vcmask 1041408
    %v773 = vsel %vm772, %v771, %v403
    %vm774 = vcmask 1042432
    %v775 = vsel %vm774, %v773, %v474
    %vm776 = vcmask 1043456
    %v777 = vsel %vm776, %v775, %v545
    %vm778 = vcmask 1044480
    %v779 = vsel %vm778, %v777, %v616
    %vm780 = vcmask 1045504
    %v781 = vsel %vm780, %v779, %v687
    %vm782 = vcmask 1046528
    %v783 = vsel %vm782, %v781, %v758
    %v784 = vld [vmem:[%s5] sm:$0xff]
    %v785 = vld [vmem:[%s5 + $0x8] sm:$0xff]
    %v786 = vld [vmem:[%s5 + $0x10] sm:$0x1]
    %v787 = vperm.slane %v786, 0
    %789 = vrot.lane.b32.xlu0 %v783, 96
    %v790 = vpop.permute.xlu0 %789
    %v791 = vsel %vm171, %v790, 0
    %793 = vmatpush.msra.mxu0 0.0
    %794 = vmatpush.msra.mxu0 0.0
    %795 = vmatpush.msra.mxu0 0.0
    %796 = vmatpush.msra.mxu0 0.0
    %797 = vmatpush.msra.mxu0 0.0
    %798 = vmatpush.msra.mxu0 0.0
    %799 = vmatpush.msra.mxu0 0.0
    %800 = vmatpush.msra.mxu0 0.0
    %801 = vmatpush.msra.mxu0 0.0
    %802 = vmatpush.msra.mxu0 0.0
    %803 = vmatpush.msra.mxu0 0.0
    %804 = vmatpush.msra.mxu0 0.0
    %805 = vmatpush.msra.mxu0 0.0
    %806 = vmatpush.msra.mxu0 0.0
    %807 = vmatpush.msra.mxu0 %v785
    %808 = vmatpush.msra.mxu0 %v784
    %809 = vmatmul.f32.gmra.mxu0 %v791
    %v810 = vpop.f32.mrf.mxu0
    %v811 = vadd.f32 %v787, %v810
    %812 = vdwg.mxu0
    %vm813 = vcmask 31744
    %814 = vst.msk [vmem:[%s6] sm:$0xff] %vm813, %v811
    // Predicated region
    $region26: #{net_forward.1} parent=1 // pred_check
      _
    $region27: #{net_forward.1} parent=1 // pred_check_branch
      %816 = sbr.rel (0) target = $region29
    $region28: #{net_forward.1} parent=1 // pred_region
      _
    $region29: #{net_forward.1} parent=1 // pred_fallthru
      _
    // Predicated region
    $region30: #{net_forward.1} parent=1 // pred_check
      _
    $region31: #{net_forward.1} parent=1 // pred_check_branch
      %818 = sbr.rel (0) target = $region33
    $region32: #{net_forward.1} parent=1 // pred_region
      %820 = vsyncadd [#allocation3], 0
      %s822 = sshll.u32 [#allocation2], 4
      %s823 = int_to_ptr.vmem [resolvable:$true] %s822
      %s824 = sshll.u32 %s7, 4
      %s825 = int_to_ptr.hbm [resolvable:$true] %s824
      %827 = dma.vmem_to_hbm [thread:$0]  %s823, 16, %s825, [#allocation3]
    $region33: #{net_forward.1} parent=1 // pred_fallthru
      _
    // Predicated region
    $region34: #{net_forward.1} parent=1 // pred_check
      _
    $region35: #{net_forward.1} parent=1 // pred_check_branch
      %829 = sbr.rel (0) target = $region37
    $region36: #{net_forward.1} parent=1 // pred_region
      %831 = vsyncadd [#allocation5], 0
      %s833 = sshll.u32 [#allocation4], 4
      %s834 = int_to_ptr.vmem [resolvable:$true] %s833
      %s835 = sshll.u32 %s8, 4
      %s836 = int_to_ptr.hbm [resolvable:$true] %s835
      %838 = dma.vmem_to_hbm [thread:$0]  %s834, 16, %s836, [#allocation5]
    $region37: #{net_forward.1} parent=1 // pred_fallthru
      _
    // Predicated region
    $region38: #{net_forward.1} parent=1 // pred_check
      _
    $region39: #{net_forward.1} parent=1 // pred_check_branch
      %840 = sbr.rel (0) target = $region41
    $region40: #{net_forward.1} parent=1 // pred_region
      _
    $region41: #{net_forward.1} parent=1 // pred_fallthru
      _
    // Predicated region
    $region42: #{net_forward.1} parent=1 // pred_check
      _
    $region43: #{net_forward.1} parent=1 // pred_check_branch
      %842 = sbr.rel (0) target = $region45
    $region44: #{net_forward.1} parent=1 // pred_region
      %844 = dma.done [#allocation3], 16
    $region45: #{net_forward.1} parent=1 // pred_fallthru
      _
    // Predicated region
    $region46: #{net_forward.1} parent=1 // pred_check
      _
    $region47: #{net_forward.1} parent=1 // pred_check_branch
      %846 = sbr.rel (0) target = $region49
    $region48: #{net_forward.1} parent=1 // pred_region
      %848 = dma.done [#allocation5], 16
    $region49: #{net_forward.1} parent=1 // pred_fallthru
      _
    %849 = vsyncpa [#allocation3], 1
    %850 = vsyncpa [#allocation5], 1

</llo_original>
